<compile_context>
chip_gen: v7x
topology: tpu7x:2x2x1
jax: 0.10.0
libtpu: 0.0.40
codegen_flags: <defaults>
</compile_context>

<pallas_src>
import functools

import jax
import jax.numpy as jnp
from jax.experimental import pallas as pl
from jax.experimental.pallas import tpu as pltpu


# ------------------------------- Pallas kernel ------------------------------ #
def _mstd_kernel(x_ref, o_ref, *, feat, tail, alpha):
    # x_ref: (N, feat)        f32  -- x flattened as (N, C*H*W), fully VMEM-resident
    # o_ref: (N, feat + tail) f32  -- [ x | stddev-constant map ] per batch row
    x = x_ref[...]                                           # (N, feat)
    n = x.shape[0]

    mean0 = jnp.mean(x, axis=0, keepdims=True)               # (1, feat)  sublane reduce (XLU)
    diff = x - mean0                                         # VPU
    var = jnp.mean(diff * diff, axis=0, keepdims=True)       # (1, feat)
    std = jnp.sqrt(var + alpha)                              # (1, feat)  EUP
    scalar = jnp.mean(std)                                   # ()         lane reduce (XLU)

    # fused "concat": passthrough of x, then the broadcast scalar channel
    o_ref[:, :feat] = x
    o_ref[:, feat:] = jnp.broadcast_to(scalar.reshape(1, 1),
                                       (n, tail)).astype(o_ref.dtype)


# ------------------------------ wrapper ------------------------------------- #
def minibatch_stddev(x, alpha=1e-8):
    """x: (N, C, H, W) f32  ->  (N, C+1, H, W) f32 (x with appended std-constant map)."""
    N, C, H, W = x.shape
    feat = C * H * W
    tail = H * W

    x2d = x.reshape(N, feat)          # free reshape: contiguous NCHW flatten

    out2d = pl.pallas_call(
        functools.partial(_mstd_kernel, feat=feat, tail=tail, alpha=float(alpha)),
        out_shape=jax.ShapeDtypeStruct((N, feat + tail), x.dtype),
        grid=(1,),
        in_specs=[pl.BlockSpec((N, feat), lambda i: (0, 0))],
        out_specs=pl.BlockSpec((N, feat + tail), lambda i: (0, 0)),
        compiler_params=pltpu.CompilerParams(
            dimension_semantics=("arbitrary",),
            vmem_limit_bytes=32 * 1024 * 1024,
        ),
    )(x2d)

    # free reshape back: channel C of the result is the constant std map
    return out2d.reshape(N, C + 1, H, W)


class MinibatchStdDev:
    """JAX/Pallas port of networks.layers.MinibatchStdDev (no parameters)."""

    def __call__(self, x, alpha=1e-8):
        return minibatch_stddev(x, alpha=alpha)


# --------------------------------- main ------------------------------------- #
if __name__ == "__main__":
    key = jax.random.PRNGKey(0)
    N, C, H, W = 2, 4, 16, 16
    x = jax.random.normal(key, (N, C, H, W), dtype=jnp.float32)

    layer = MinibatchStdDev()
    y = jax.jit(layer.__call__)(x)
    y = jax.block_until_ready(y)

    # silent correctness check against a pure-JAX reference
    alpha = 1e-8
    mean0 = jnp.mean(x, axis=0, keepdims=True)
    std = jnp.sqrt(jnp.mean((x - mean0) ** 2, axis=0) + alpha)   # (C, H, W)
    s = jnp.mean(std)
    y_ref = jnp.concatenate(
        [x, jnp.full((N, 1, H, W), s, dtype=x.dtype)], axis=1)

    assert y.shape == (N, C + 1, H, W)
    assert jnp.allclose(y, y_ref, rtol=1e-5, atol=1e-6)

    print("KERNEL_OK")
</pallas_src>

<mosaic_0001>
module attributes {stable_mosaic.version = 11 : i64} {
  func.func @_mstd_kernel(%arg0: i32, %arg1: memref<2x1024xf32, #tpu.memory_space<vmem>>, %arg2: memref<2x1280xf32, #tpu.memory_space<vmem>>) attributes {dimension_semantics = [#tpu.dimension_semantics<arbitrary>], iteration_bounds = array<i64: 1>, scalar_prefetch = 0 : i64, scratch_operands = 0 : i64, tpu.core_type = #tpu.core_type<tc>, window_params = [{pipeline_mode = #tpu.pipeline_mode<synchronous>, transform_indices = @transform_0, window_bounds = array<i64: 2, 1024>}, {pipeline_mode = #tpu.pipeline_mode<synchronous>, transform_indices = @transform_1, window_bounds = array<i64: 2, 1280>}]} {
    %c0 = arith.constant 0 : index
    %c0_0 = arith.constant 0 : index
    %0 = vector.load %arg1[%c0, %c0_0] : memref<2x1024xf32, #tpu.memory_space<vmem>>, vector<2x1024xf32>
    %cst = arith.constant dense<0.000000e+00> : vector<1024xf32>
    %1 = vector.multi_reduction <add>, %0, %cst [0] : vector<2x1024xf32> to vector<1024xf32>
    %2 = vector.shape_cast %1 : vector<1024xf32> to vector<1x1024xf32>
    %cst_1 = arith.constant 2.000000e+00 : f32
    %3 = vector.broadcast %cst_1 : f32 to vector<1x1024xf32>
    %4 = arith.divf %2, %3 : vector<1x1024xf32>
    %5 = vector.broadcast %4 : vector<1x1024xf32> to vector<2x1024xf32>
    %6 = arith.subf %0, %5 : vector<2x1024xf32>
    %7 = arith.mulf %6, %6 : vector<2x1024xf32>
    %cst_2 = arith.constant dense<0.000000e+00> : vector<1024xf32>
    %8 = vector.multi_reduction <add>, %7, %cst_2 [0] : vector<2x1024xf32> to vector<1024xf32>
    %9 = vector.shape_cast %8 : vector<1024xf32> to vector<1x1024xf32>
    %cst_3 = arith.constant 2.000000e+00 : f32
    %10 = vector.broadcast %cst_3 : f32 to vector<1x1024xf32>
    %11 = arith.divf %9, %10 : vector<1x1024xf32>
    %cst_4 = arith.constant 9.99999993E-9 : f32
    %12 = vector.broadcast %cst_4 : f32 to vector<1x1024xf32>
    %13 = arith.addf %11, %12 : vector<1x1024xf32>
    %14 = math.sqrt %13 : vector<1x1024xf32>
    %15 = vector.shape_cast %14 : vector<1x1024xf32> to vector<1x1x1024xf32>
    %cst_5 = arith.constant dense<0.000000e+00> : vector<1xf32>
    %16 = vector.multi_reduction <add>, %15, %cst_5 [1, 2] : vector<1x1x1024xf32> to vector<1xf32>
    %17 = vector.shape_cast %16 : vector<1xf32> to vector<1x1x1xf32>
    %18 = vector.extract %17[0, 0, 0] : f32 from vector<1x1x1xf32>
    %cst_6 = arith.constant 1.024000e+03 : f32
    %19 = arith.divf %18, %cst_6 : f32
    %c0_7 = arith.constant 0 : index
    %c0_8 = arith.constant 0 : index
    %20 = vector.load %arg2[%c0_7, %c0_8] : memref<2x1280xf32, #tpu.memory_space<vmem>>, vector<2x1024xf32>
    tpu.vector_store %arg2[%c0_7, %c0_8], %0 {strides = array<i32>} : memref<2x1280xf32, #tpu.memory_space<vmem>>, vector<2x1024xf32>,
    %21 = vector.broadcast %19 : f32 to vector<1x1xf32>
    %22 = vector.shape_cast %21 : vector<1x1xf32> to vector<1x1xf32>
    %23 = vector.broadcast %22 : vector<1x1xf32> to vector<2x256xf32>
    %c0_9 = arith.constant 0 : index
    %c1024 = arith.constant 1024 : index
    %24 = vector.load %arg2[%c0_9, %c1024] : memref<2x1280xf32, #tpu.memory_space<vmem>>, vector<2x256xf32>
    tpu.vector_store %arg2[%c0_9, %c1024], %23 {strides = array<i32>} : memref<2x1280xf32, #tpu.memory_space<vmem>>, vector<2x256xf32>,
    return
  }
  func.func @transform_0(%arg0: i32) -> (i32, i32) {
    %c0_i32 = arith.constant 0 : i32
    %c0_i32_0 = arith.constant 0 : i32
    %c0_i32_1 = arith.constant 0 : i32
    return %c0_i32, %c0_i32_0 : i32, i32
  }
  func.func @transform_1(%arg0: i32) -> (i32, i32) {
    %c0_i32 = arith.constant 0 : i32
    %c0_i32_0 = arith.constant 0 : i32
    %c0_i32_1 = arith.constant 0 : i32
    return %c0_i32, %c0_i32_0 : i32, i32
  }
}

</mosaic_0001>

<llo_original>
// kernel: a_call__.1
$region0: #{a_call__.1}
  #allocation0 [shape = 'u32[]', space=smem, size = 0x4, offset = 0x4, fixed_abs, tag = 'smem constant byte address 0x4 - core index']
  #allocation1 [shape = 'u32[144,128]{1,0:T(1,128)}', space=vmem, size = 0x12000, scoped, tag = 'internal scratch']
  %s0 = inlined_call_operand.vmem [shape: f32[2,1024], index: 0, kind: input, shape index: {}]
  %s1 = inlined_call_operand.vmem [shape: f32[2,1280], index: 1, kind: output, shape index: {}]
  %s2 = sld [smem:[#allocation0]]
  $region14: #{a_call__.1} parent=0
    _
  %s4 = ssub.s32 1, %s2
  %s5 = scalar_select 0, %s4, %s2
  // Predicated region
  $region2: #{a_call__.1} parent=0 // pred_check
    _
  $region3: #{a_call__.1} parent=0 // pred_check_branch
    %7 = sbr.rel (0) target = $region5
  $region4: #{a_call__.1} parent=0 // pred_region
    _
  $region5: #{a_call__.1} parent=0 // pred_fallthru
    _
  %v8 = vld [vmem:[%s0] sm:$0xff]
  %v9 = vld [vmem:[%s0 + $0x8] sm:$0xff]
  %v12 = vcombine.high %v8, %v8
  %v14 = vunpack.c.l.s4 1983009808
  %v15 = vunpack.c.0.s8 %v14
  %v16 = vlaneseq
  %v17 = vshrl.u32 %v16, 7
  %v18 = vsub.s32 %v15, %v17
  %v19 = vrot.slane %v8, %v18
  %v21 = vunpack.c.l.s4 1983009808
  %v22 = vunpack.c.0.s8 %v21
  %v23 = vlaneseq
  %v24 = vshrl.u32 %v23, 7
  %v25 = vsub.s32 %v22, %v24
  %v26 = vrot.slane %v12, %v25
  %v27 = vcombine.high %v19, %v19
  %v28 = vcombine.high %v26, %v26
  %v29 = vcombine.high %v9, %v9
  %v31 = vunpack.c.l.s4 1983009808
  %v32 = vunpack.c.0.s8 %v31
  %v33 = vlaneseq
  %v34 = vshrl.u32 %v33, 7
  %v35 = vsub.s32 %v32, %v34
  %v36 = vrot.slane %v9, %v35
  %v38 = vunpack.c.l.s4 1983009808
  %v39 = vunpack.c.0.s8 %v38
  %v40 = vlaneseq
  %v41 = vshrl.u32 %v40, 7
  %v42 = vsub.s32 %v39, %v41
  %v43 = vrot.slane %v29, %v42
  %v44 = vcombine.high %v36, %v36
  %v45 = vcombine.high %v43, %v43
  %vm54 = vcmask 1041408
  %v55 = vsel %vm54, %v19, 0.0
  %v56 = vrot.slane %v55, 4
  %v57 = vadd.f32 %v55, %v56
  %v58 = vrot.slane %v57, 2
  %v59 = vadd.f32 %v57, %v58
  %v60 = vrot.slane %v59, 1
  %v61 = vadd.f32 %v59, %v60
  %v62 = vsel %vm54, %v27, 0.0
  %v63 = vrot.slane %v62, 4
  %v64 = vadd.f32 %v62, %v63
  %v65 = vrot.slane %v64, 2
  %v66 = vadd.f32 %v64, %v65
  %v67 = vrot.slane %v66, 1
  %v68 = vadd.f32 %v66, %v67
  %v69 = vsel %vm54, %v26, 0.0
  %v70 = vrot.slane %v69, 4
  %v71 = vadd.f32 %v69, %v70
  %v72 = vrot.slane %v71, 2
  %v73 = vadd.f32 %v71, %v72
  %v74 = vrot.slane %v73, 1
  %v75 = vadd.f32 %v73, %v74
  %v76 = vsel %vm54, %v28, 0.0
  %v77 = vrot.slane %v76, 4
  %v78 = vadd.f32 %v76, %v77
  %v79 = vrot.slane %v78, 2
  %v80 = vadd.f32 %v78, %v79
  %v81 = vrot.slane %v80, 1
  %v82 = vadd.f32 %v80, %v81
  %v83 = vsel %vm54, %v36, 0.0
  %v84 = vrot.slane %v83, 4
  %v85 = vadd.f32 %v83, %v84
  %v86 = vrot.slane %v85, 2
  %v87 = vadd.f32 %v85, %v86
  %v88 = vrot.slane %v87, 1
  %v89 = vadd.f32 %v87, %v88
  %v90 = vsel %vm54, %v44, 0.0
  %v91 = vrot.slane %v90, 4
  %v92 = vadd.f32 %v90, %v91
  %v93 = vrot.slane %v92, 2
  %v94 = vadd.f32 %v92, %v93
  %v95 = vrot.slane %v94, 1
  %v96 = vadd.f32 %v94, %v95
  %v97 = vsel %vm54, %v43, 0.0
  %v98 = vrot.slane %v97, 4
  %v99 = vadd.f32 %v97, %v98
  %v100 = vrot.slane %v99, 2
  %v101 = vadd.f32 %v99, %v100
  %v102 = vrot.slane %v101, 1
  %v103 = vadd.f32 %v101, %v102
  %v104 = vsel %vm54, %v45, 0.0
  %v105 = vrot.slane %v104, 4
  %v106 = vadd.f32 %v104, %v105
  %v107 = vrot.slane %v106, 2
  %v108 = vadd.f32 %v106, %v107
  %v109 = vrot.slane %v108, 1
  %v110 = vadd.f32 %v108, %v109
  %v111 = vrcp.pop 2.0
  %v112 = vmul.f32 %v61, %v111
  %v113 = vmul.f32 %v68, %v111
  %v114 = vmul.f32 %v75, %v111
  %v115 = vmul.f32 %v82, %v111
  %v116 = vmul.f32 %v89, %v111
  %v117 = vmul.f32 %v96, %v111
  %v118 = vmul.f32 %v103, %v111
  %v119 = vmul.f32 %v110, %v111
  %v128 = vcombine.low %v112, %v113
  %v129 = vcombine.low %v114, %v115
  %v131 = vunpack.c.l.s4 1983009808
  %v132 = vunpack.c.0.s8 %v131
  %v133 = vlaneseq
  %v134 = vshrl.u32 %v133, 7
  %v135 = vsub.s32 %v132, %v134
  %v136 = vrot.slane %v128, %v135
  %v138 = vunpack.c.l.s4 1983009808
  %v139 = vunpack.c.0.s8 %v138
  %v140 = vlaneseq
  %v141 = vshrl.u32 %v140, 7
  %v142 = vsub.s32 %v139, %v141
  %v143 = vrot.slane %v129, %v142
  %v144 = vcombine.low %v136, %v143
  %v145 = vcombine.low %v116, %v117
  %v146 = vcombine.low %v118, %v119
  %v148 = vunpack.c.l.s4 1983009808
  %v149 = vunpack.c.0.s8 %v148
  %v150 = vlaneseq
  %v151 = vshrl.u32 %v150, 7
  %v152 = vsub.s32 %v149, %v151
  %v153 = vrot.slane %v145, %v152
  %v155 = vunpack.c.l.s4 1983009808
  %v156 = vunpack.c.0.s8 %v155
  %v157 = vlaneseq
  %v158 = vshrl.u32 %v157, 7
  %v159 = vsub.s32 %v156, %v158
  %v160 = vrot.slane %v146, %v159
  %v161 = vcombine.low %v153, %v160
  %v164 = vsub.f32 %v8, %v144
  %v165 = vsub.f32 %v9, %v161
  %v166 = vmul.f32 %v164, %v164
  %v167 = vmul.f32 %v165, %v165
  %v170 = vcombine.high %v166, %v166
  %v172 = vunpack.c.l.s4 1983009808
  %v173 = vunpack.c.0.s8 %v172
  %v174 = vlaneseq
  %v175 = vshrl.u32 %v174, 7
  %v176 = vsub.s32 %v173, %v175
  %v177 = vrot.slane %v166, %v176
  %v179 = vunpack.c.l.s4 1983009808
  %v180 = vunpack.c.0.s8 %v179
  %v181 = vlaneseq
  %v182 = vshrl.u32 %v181, 7
  %v183 = vsub.s32 %v180, %v182
  %v184 = vrot.slane %v170, %v183
  %v185 = vcombine.high %v177, %v177
  %v186 = vcombine.high %v184, %v184
  %v187 = vcombine.high %v167, %v167
  %v189 = vunpack.c.l.s4 1983009808
  %v190 = vunpack.c.0.s8 %v189
  %v191 = vlaneseq
  %v192 = vshrl.u32 %v191, 7
  %v193 = vsub.s32 %v190, %v192
  %v194 = vrot.slane %v167, %v193
  %v196 = vunpack.c.l.s4 1983009808
  %v197 = vunpack.c.0.s8 %v196
  %v198 = vlaneseq
  %v199 = vshrl.u32 %v198, 7
  %v200 = vsub.s32 %v197, %v199
  %v201 = vrot.slane %v187, %v200
  %v202 = vcombine.high %v194, %v194
  %v203 = vcombine.high %v201, %v201
  %v212 = vsel %vm54, %v177, 0.0
  %v213 = vrot.slane %v212, 4
  %v214 = vadd.f32 %v212, %v213
  %v215 = vrot.slane %v214, 2
  %v216 = vadd.f32 %v214, %v215
  %v217 = vrot.slane %v216, 1
  %v218 = vadd.f32 %v216, %v217
  %v219 = vsel %vm54, %v185, 0.0
  %v220 = vrot.slane %v219, 4
  %v221 = vadd.f32 %v219, %v220
  %v222 = vrot.slane %v221, 2
  %v223 = vadd.f32 %v221, %v222
  %v224 = vrot.slane %v223, 1
  %v225 = vadd.f32 %v223, %v224
  %v226 = vsel %vm54, %v184, 0.0
  %v227 = vrot.slane %v226, 4
  %v228 = vadd.f32 %v226, %v227
  %v229 = vrot.slane %v228, 2
  %v230 = vadd.f32 %v228, %v229
  %v231 = vrot.slane %v230, 1
  %v232 = vadd.f32 %v230, %v231
  %v233 = vsel %vm54, %v186, 0.0
  %v234 = vrot.slane %v233, 4
  %v235 = vadd.f32 %v233, %v234
  %v236 = vrot.slane %v235, 2
  %v237 = vadd.f32 %v235, %v236
  %v238 = vrot.slane %v237, 1
  %v239 = vadd.f32 %v237, %v238
  %v240 = vsel %vm54, %v194, 0.0
  %v241 = vrot.slane %v240, 4
  %v242 = vadd.f32 %v240, %v241
  %v243 = vrot.slane %v242, 2
  %v244 = vadd.f32 %v242, %v243
  %v245 = vrot.slane %v244, 1
  %v246 = vadd.f32 %v244, %v245
  %v247 = vsel %vm54, %v202, 0.0
  %v248 = vrot.slane %v247, 4
  %v249 = vadd.f32 %v247, %v248
  %v250 = vrot.slane %v249, 2
  %v251 = vadd.f32 %v249, %v250
  %v252 = vrot.slane %v251, 1
  %v253 = vadd.f32 %v251, %v252
  %v254 = vsel %vm54, %v201, 0.0
  %v255 = vrot.slane %v254, 4
  %v256 = vadd.f32 %v254, %v255
  %v257 = vrot.slane %v256, 2
  %v258 = vadd.f32 %v256, %v257
  %v259 = vrot.slane %v258, 1
  %v260 = vadd.f32 %v258, %v259
  %v261 = vsel %vm54, %v203, 0.0
  %v262 = vrot.slane %v261, 4
  %v263 = vadd.f32 %v261, %v262
  %v264 = vrot.slane %v263, 2
  %v265 = vadd.f32 %v263, %v264
  %v266 = vrot.slane %v265, 1
  %v267 = vadd.f32 %v265, %v266
  %v268 = vmul.f32 %v218, %v111
  %v269 = vmul.f32 %v225, %v111
  %v270 = vmul.f32 %v232, %v111
  %v271 = vmul.f32 %v239, %v111
  %v272 = vmul.f32 %v246, %v111
  %v273 = vmul.f32 %v253, %v111
  %v274 = vmul.f32 %v260, %v111
  %v275 = vmul.f32 %v267, %v111
  %v276 = vadd.f32 %v268, 1e-08
  %v277 = vadd.f32 %v269, 1e-08
  %v278 = vadd.f32 %v270, 1e-08
  %v279 = vadd.f32 %v271, 1e-08
  %v280 = vadd.f32 %v272, 1e-08
  %v281 = vadd.f32 %v273, 1e-08
  %v282 = vadd.f32 %v274, 1e-08
  %v283 = vadd.f32 %v275, 1e-08
  %v284 = vrsqrt.pop %v276
  %v285 = vmul.f32 %v276, %v284
  %vm286 = vcmp.eq.f32.partialorder %v276, inf
  %v287 = vsel %vm286, %v276, %v285
  %vm288 = vcmp.eq.f32.partialorder %v276, 0.0
  %v289 = vand.u32 %v276, 2147483648
  %v290 = vsel %vm288, %v289, %v287
  %v291 = vrsqrt.pop %v277
  %v292 = vmul.f32 %v277, %v291
  %vm293 = vcmp.eq.f32.partialorder %v277, inf
  %v294 = vsel %vm293, %v277, %v292
  %vm295 = vcmp.eq.f32.partialorder %v277, 0.0
  %v296 = vand.u32 %v277, 2147483648
  %v297 = vsel %vm295, %v296, %v294
  %v298 = vrsqrt.pop %v278
  %v299 = vmul.f32 %v278, %v298
  %vm300 = vcmp.eq.f32.partialorder %v278, inf
  %v301 = vsel %vm300, %v278, %v299
  %vm302 = vcmp.eq.f32.partialorder %v278, 0.0
  %v303 = vand.u32 %v278, 2147483648
  %v304 = vsel %vm302, %v303, %v301
  %v305 = vrsqrt.pop %v279
  %v306 = vmul.f32 %v279, %v305
  %vm307 = vcmp.eq.f32.partialorder %v279, inf
  %v308 = vsel %vm307, %v279, %v306
  %vm309 = vcmp.eq.f32.partialorder %v279, 0.0
  %v310 = vand.u32 %v279, 2147483648
  %v311 = vsel %vm309, %v310, %v308
  %v312 = vrsqrt.pop %v280
  %v313 = vmul.f32 %v280, %v312
  %vm314 = vcmp.eq.f32.partialorder %v280, inf
  %v315 = vsel %vm314, %v280, %v313
  %vm316 = vcmp.eq.f32.partialorder %v280, 0.0
  %v317 = vand.u32 %v280, 2147483648
  %v318 = vsel %vm316, %v317, %v315
  %v319 = vrsqrt.pop %v281
  %v320 = vmul.f32 %v281, %v319
  %vm321 = vcmp.eq.f32.partialorder %v281, inf
  %v322 = vsel %vm321, %v281, %v320
  %vm323 = vcmp.eq.f32.partialorder %v281, 0.0
  %v324 = vand.u32 %v281, 2147483648
  %v325 = vsel %vm323, %v324, %v322
  %v326 = vrsqrt.pop %v282
  %v327 = vmul.f32 %v282, %v326
  %vm328 = vcmp.eq.f32.partialorder %v282, inf
  %v329 = vsel %vm328, %v282, %v327
  %vm330 = vcmp.eq.f32.partialorder %v282, 0.0
  %v331 = vand.u32 %v282, 2147483648
  %v332 = vsel %vm330, %v331, %v329
  %v333 = vrsqrt.pop %v283
  %v334 = vmul.f32 %v283, %v333
  %vm335 = vcmp.eq.f32.partialorder %v283, inf
  %v336 = vsel %vm335, %v283, %v334
  %vm337 = vcmp.eq.f32.partialorder %v283, 0.0
  %v338 = vand.u32 %v283, 2147483648
  %v339 = vsel %vm337, %v338, %v336
  %vm340 = vcmask 1040384
  %v341 = vsel %vm340, %v290, 0.0
  %v342 = vsel %vm340, %v297, 0.0
  %v343 = vadd.f32 %v341, %v342
  %v344 = vsel %vm340, %v304, 0.0
  %v345 = vadd.f32 %v343, %v344
  %v346 = vsel %vm340, %v311, 0.0
  %v347 = vadd.f32 %v345, %v346
  %v348 = vsel %vm340, %v318, 0.0
  %v349 = vadd.f32 %v347, %v348
  %v350 = vsel %vm340, %v325, 0.0
  %v351 = vadd.f32 %v349, %v350
  %v352 = vsel %vm340, %v332, 0.0
  %v353 = vadd.f32 %v351, %v352
  %v354 = vsel %vm340, %v339, 0.0
  %v355 = vadd.f32 %v353, %v354
  %356 = vadd.xlane.f32.xlu0 %v355
  %v357 = vpop.xlane.xlu0 %356
  %v358 = vrot.slane %v357, 4
  %v359 = vadd.f32 %v357, %v358
  %v360 = vrot.slane %v359, 2
  %v361 = vadd.f32 %v359, %v360
  %v362 = vrot.slane %v361, 1
  %v363 = vadd.f32 %v361, %v362
  %s364 = vtos %v363
  %v365 = vrcp.pop 1024.0
  %s366 = vtos %v365
  %s367 = smul.f32 %s364, %s366
  %368 = vst [vmem:[%s1] sm:$0xff] %v8
  %369 = vst [vmem:[%s1 + $0x8] sm:$0xff] %v9
  %v370 = vstv %s367
  %371 = vst [vmem:[%s1 + $0x10] sm:$0xf] %v370
  // Predicated region
  $region6: #{a_call__.1} parent=0 // pred_check
    _
  $region7: #{a_call__.1} parent=0 // pred_check_branch
    %373 = sbr.rel (0) target = $region9
  $region8: #{a_call__.1} parent=0 // pred_region
    _
  $region9: #{a_call__.1} parent=0 // pred_fallthru
    _
  // Predicated region
  $region10: #{a_call__.1} parent=0 // pred_check
    _
  $region11: #{a_call__.1} parent=0 // pred_check_branch
    %375 = sbr.rel (0) target = $region13
  $region12: #{a_call__.1} parent=0 // pred_region
    _
  $region13: #{a_call__.1} parent=0 // pred_fallthru
    _

</llo_original>
